<compile_context>
chip_gen: v7x
topology: tpu7x:2x2x1
jax: 0.10.0
libtpu: 0.0.40
codegen_flags: <defaults>
</compile_context>

<pallas_src>
import functools

import jax
import jax.numpy as jnp
from jax import lax
from jax.experimental import pallas as pl
from jax.experimental.pallas import tpu as pltpu

_MIB = 1 << 20


def _round_up(x, m):
    return (x + m - 1) // m * m


def _vmem_capacity_bytes():
    try:
        info = pltpu.get_tpu_info()
        cap = int(getattr(info, "vmem_capacity_bytes", 0))
        if cap > 0:
            return cap
    except Exception:
        pass
    # Conservative fallback: v7x has the smallest per-core VMEM (64 MiB).
    # (Under AOT/cross-compilation this may not match the target chip; that is
    # a perf risk only, never a correctness issue.)
    return 64 * _MIB


def _auto_config(k, D, sig_itemsize):
    """Pick (block_k, vmem_limit_bytes). Stream budget capped at ~32 MiB."""
    cap = _vmem_capacity_bytes()
    d_lane = _round_up(D, 128)                       # lane padding (784 -> 896)
    d_sub = _round_up(D, 16 if sig_itemsize == 2 else 8)
    # HBM-streamed bytes per k per pipeline buffer (Sigma row + diffs row).
    per_k = d_sub * d_lane * sig_itemsize + d_lane * 4
    # Per-k Sigma DMA (>= 1 MiB at module shapes) already dwarfs the ~0.35us
    # per-grid-step overhead, so bigger double-buffered streams buy nothing.
    stream_budget = min(32 * _MIB, int(cap * 0.5))

    # Prefer sublane-friendly block_k (multiple of 8, or == k).
    cands = [c for c in (1 << s for s in range(16))
             if c <= k and k % c == 0 and (c % 8 == 0 or c == k)]
    all_c = [c for c in (1 << s for s in range(16)) if c <= k and k % c == 0]
    if not cands:
        cands = all_c
    fitting = [c for c in cands if 2 * c * per_k <= stream_budget]
    if not fitting:
        fitting = [c for c in all_c if 2 * c * per_k <= stream_budget] or all_c[:1]
    block_k = fitting[-1]
    # Prefer >= 2 grid blocks so the "parallel" axis can shard across v7x's 2 TCs.
    if block_k == k and len(fitting) >= 2:
        block_k = fitting[-2]

    # Small working set: a few (1/8, d_lane) rows, the (1,8,128) out tile
    # (double-buffered), plus slack for Mosaic internal scratch.
    fixed = 4 * 8 * d_lane * 4 + 2 * 8 * 128 * 4 + 2 * _MIB
    needed = 2 * block_k * per_k + fixed
    vmem_limit = max(needed + 16 * _MIB, 32 * _MIB)
    vmem_limit = min(vmem_limit, cap - 4 * _MIB)
    return block_k, int(vmem_limit)


def _ellipse_loss_kernel(y_sref, diffs_ref, sig_ref, out_ref, *,
                         block_k, mm_precision):
    """Grid step i: partial_i = sum_{k in block i} (sqrt(d2_k + 1e-8) - y_k)**2."""
    i = pl.program_id(0)
    sig_dtype = sig_ref.dtype

    def body(kk, acc):
        dr = diffs_ref[pl.ds(kk, 1), :]                      # (1, D) f32
        sig_k = sig_ref[kk]                                  # (D, D) streamed dtype
        # MXU vector-matrix product with f32 accumulation (no full-tile upcast).
        tmp = jnp.dot(dr.astype(sig_dtype), sig_k,
                      preferred_element_type=jnp.float32,
                      precision=mm_precision)                # (1, D) f32
        d2 = jnp.sum(tmp * dr)                               # f32 scalar
        d = jnp.sqrt(d2 + 1e-8)
        r = d - y_sref[i * block_k + kk]                     # y resident in SMEM
        return acc + r * r

    partial = lax.fori_loop(0, block_k, body, jnp.float32(0.0))

    # Lane-dense (1, 8, 128) output tile; only element [0, 0, 0] carries the
    # partial (rest zero), so summing the full partials array is correct.
    row = lax.broadcasted_iota(jnp.int32, out_ref.shape, 1)
    col = lax.broadcasted_iota(jnp.int32, out_ref.shape, 2)
    out_ref[...] = jnp.where((row == 0) & (col == 0), partial, 0.0)


def elliptical_intersection_loss(x, mus, inv_sigmas, y, *,
                                 block_k=None, sigma_dtype=jnp.bfloat16,
                                 vmem_limit_bytes=None):
    """x: (D,), mus: (k, D), inv_sigmas: (k, D, D), y: (k,) -> scalar loss.

    sigma_dtype controls the streamed dtype of inv_Sigmas only (HBM-bound
    kernel); accumulation is always f32. Pass jnp.float32 for exact numerics.
    """
    k, D = mus.shape
    assert inv_sigmas.shape == (k, D, D)

    sig = inv_sigmas.astype(sigma_dtype)
    itemsize = jnp.dtype(sigma_dtype).itemsize
    auto_bk, auto_vmem = _auto_config(k, D, itemsize)
    if block_k is None:
        block_k = auto_bk
    if vmem_limit_bytes is None:
        vmem_limit_bytes = auto_vmem
    assert k % block_k == 0, (k, block_k)
    num_blocks = k // block_k

    # Precompute diffs once in the wrapper; stream as a sublane-dense (k, D) tile.
    diffs = (x.reshape(1, D).astype(jnp.float32)
             - mus.astype(jnp.float32))                       # (k, D) f32
    y1 = y.reshape(k).astype(jnp.float32)

    mm_precision = (lax.Precision.HIGHEST
                    if jnp.dtype(sigma_dtype) == jnp.float32 else None)

    cost = pl.CostEstimate(
        flops=int(2 * k * D * D + 3 * k * D + 4 * k),
        transcendentals=int(k),
        bytes_accessed=int(k * D * D * itemsize + k * D * 4 + k * 4
                           + num_blocks * 8 * 128 * 4),
    )

    partials = pl.pallas_call(
        functools.partial(_ellipse_loss_kernel, block_k=block_k,
                          mm_precision=mm_precision),
        out_shape=jax.ShapeDtypeStruct((num_blocks, 8, 128), jnp.float32),
        grid_spec=pltpu.PrefetchScalarGridSpec(
            num_scalar_prefetch=1,                                   # y -> SMEM
            grid=(num_blocks,),
            in_specs=[
                pl.BlockSpec((block_k, D), lambda i, y_ref: (i, 0)),        # diffs
                pl.BlockSpec((block_k, D, D), lambda i, y_ref: (i, 0, 0)),  # Sigma^-1
            ],
            out_specs=pl.BlockSpec((1, 8, 128), lambda i, y_ref: (i, 0, 0)),
        ),
        compiler_params=pltpu.CompilerParams(
            dimension_semantics=("parallel",),
            vmem_limit_bytes=int(vmem_limit_bytes),
        ),
        cost_estimate=cost,
    )(y1, diffs, sig)

    return 0.5 * jnp.sum(partials)


def _reference_loss(x, mus, inv_sigmas, y, *, quantize_dtype=None):
    diffs = x[None, :] - mus                                          # (k, D)
    lhs = diffs
    sig = inv_sigmas
    if quantize_dtype is not None:
        lhs = lhs.astype(quantize_dtype).astype(jnp.float32)
        sig = sig.astype(quantize_dtype).astype(jnp.float32)
    d2 = jnp.einsum('ki,kij,kj->k', lhs, sig, diffs,
                    precision=lax.Precision.HIGHEST)[:, None]
    d = jnp.sqrt(d2 + 1e-8)
    return 0.5 * jnp.sum((d - y.reshape(-1, 1)) ** 2)


if __name__ == "__main__":
    # Small shapes consistent with the module (module uses D=784, k=1024).
    D = 128
    k = 16

    key = jax.random.PRNGKey(0)
    k_as, k_mus, k_y, k_x = jax.random.split(key, 4)

    As = jax.random.normal(k_as, (k, D, D), dtype=jnp.float32)
    Sigmas = jnp.matmul(As, jnp.swapaxes(As, -1, -2)) + 0.5 * jnp.eye(D, dtype=jnp.float32)
    inv_Sigmas = jnp.linalg.inv(Sigmas)
    mus = jax.random.normal(k_mus, (k, D), dtype=jnp.float32)
    y = jax.random.normal(k_y, (k,), dtype=jnp.float32)
    x = jax.random.normal(k_x, (D,), dtype=jnp.float32)

    ref = jax.block_until_ready(_reference_loss(x, mus, inv_Sigmas, y))

    # 1) f32 Sigma, explicit block (exercises multi-block grid + MXU HIGHEST path).
    loss_f32 = jax.block_until_ready(
        elliptical_intersection_loss(x, mus, inv_Sigmas, y,
                                     block_k=8, sigma_dtype=jnp.float32))
    assert jnp.isfinite(loss_f32), "f32 kernel produced non-finite loss"
    assert jnp.allclose(loss_f32, ref, rtol=1e-3, atol=1e-3), (loss_f32, ref)

    # 2) auto-tuned block_k / vmem_limit, f32 escape hatch.
    loss_auto = jax.block_until_ready(
        elliptical_intersection_loss(x, mus, inv_Sigmas, y, sigma_dtype=jnp.float32))
    assert jnp.allclose(loss_auto, ref, rtol=1e-3, atol=1e-3), (loss_auto, ref)

    # 3) default path: bf16 Sigma streaming (halves HBM bytes). Compare against a
    #    matched bf16-quantized reference (same math structure, f32 accumulation).
    ref_bf16 = jax.block_until_ready(
        _reference_loss(x, mus, inv_Sigmas, y, quantize_dtype=jnp.bfloat16))
    loss_bf16 = jax.block_until_ready(
        elliptical_intersection_loss(x, mus, inv_Sigmas, y))
    assert jnp.isfinite(loss_bf16), "bf16 kernel produced non-finite loss"
    assert jnp.allclose(loss_bf16, ref_bf16, rtol=1e-2, atol=1e-2), (loss_bf16, ref_bf16)
    # Sanity: bf16 result should also be close to the exact f32 reference.
    assert jnp.allclose(loss_bf16, ref, rtol=5e-2, atol=5e-2), (loss_bf16, ref)

    print("KERNEL_OK")
</pallas_src>

<mosaic_0001>
module attributes {stable_mosaic.version = 11 : i64} {
  func.func @_ellipse_loss_kernel(%arg0: i32, %arg1: memref<16xf32, #tpu.memory_space<smem>>, %arg2: memref<8x128xf32, #tpu.memory_space<vmem>>, %arg3: memref<8x128x128xf32, #tpu.memory_space<vmem>>, %arg4: memref<1x8x128xf32, #tpu.memory_space<vmem>>) attributes {dimension_semantics = [#tpu.dimension_semantics<parallel>], iteration_bounds = array<i64: 2>, scalar_prefetch = 1 : i64, scratch_operands = 0 : i64, tpu.core_type = #tpu.core_type<tc>, window_params = [{transform_indices = @transform_0, window_bounds = array<i64: 8, 128>}, {transform_indices = @transform_1, window_bounds = array<i64: 8, 128, 128>}, {transform_indices = @transform_2, window_bounds = array<i64: 1, 8, 128>}]} {
    %cst = arith.constant 0.000000e+00 : f32
    %c0_i32 = arith.constant 0 : i32
    %c8_i32 = arith.constant 8 : i32
    %0 = arith.addi %c0_i32, %c8_i32 : i32
    %c1_i32 = arith.constant 1 : i32
    %1 = scf.for %arg5 = %c0_i32 to %0 step %c1_i32 iter_args(%arg6 = %cst) -> (f32)  : i32 {
      %13 = arith.index_cast %arg5 : i32 to index
      %c0_6 = arith.constant 0 : index
      %14 = vector.load %arg2[%13, %c0_6] : memref<8x128xf32, #tpu.memory_space<vmem>>, vector<1x128xf32>
      %15 = arith.index_cast %arg5 : i32 to index
      %c0_7 = arith.constant 0 : index
      %c0_8 = arith.constant 0 : index
      %16 = vector.load %arg3[%15, %c0_7, %c0_8] : memref<8x128x128xf32, #tpu.memory_space<vmem>>, vector<1x128x128xf32>
      %17 = vector.shape_cast %16 : vector<1x128x128xf32> to vector<128x128xf32>
      %cst_9 = arith.constant dense<0.000000e+00> : vector<1x128xf32>
      %18 = tpu.matmul %14, %17, %cst_9 {dimension_numbers = #tpu.dot_dimension_numbers<[1], [0], [0], [1], [0, 0, 1, 1], [], []>, precision = #tpu.contract_precision<fp32>} : vector<1x128xf32>, vector<128x128xf32>, vector<1x128xf32> -> vector<1x128xf32>
      %19 = arith.mulf %18, %14 : vector<1x128xf32>
      %20 = vector.shape_cast %19 : vector<1x128xf32> to vector<1x1x128xf32>
      %cst_10 = arith.constant dense<0.000000e+00> : vector<1xf32>
      %21 = vector.multi_reduction <add>, %20, %cst_10 [1, 2] : vector<1x1x128xf32> to vector<1xf32>
      %22 = vector.shape_cast %21 : vector<1xf32> to vector<1x1x1xf32>
      %23 = vector.extract %22[0, 0, 0] : f32 from vector<1x1x1xf32>
      %cst_11 = arith.constant 9.99999993E-9 : f32
      %24 = arith.addf %23, %cst_11 : f32
      %25 = math.sqrt %24 : f32
      %c8_i32_12 = arith.constant 8 : i32
      %26 = arith.muli %arg0, %c8_i32_12 : i32
      %27 = arith.addi %26, %arg5 : i32
      %28 = arith.index_cast %27 : i32 to index
      %29 = memref.load %arg1[%28] : memref<16xf32, #tpu.memory_space<smem>>
      %30 = arith.subf %25, %29 : f32
      %31 = arith.mulf %30, %30 : f32
      %32 = arith.addf %arg6, %31 : f32
      scf.yield %32 : f32
    }
    %c8_i32_0 = arith.constant 8 : i32
    %2 = tpu.iota {dimensions = array<i32: 1>} : vector<1x8x128xi32>
    %3 = tpu.iota {dimensions = array<i32: 2>} : vector<1x8x128xi32>
    %c0_i32_1 = arith.constant 0 : i32
    %4 = vector.broadcast %c0_i32_1 : i32 to vector<1x8x128xi32>
    %5 = arith.cmpi eq, %2, %4 : vector<1x8x128xi32>
    %c0_i32_2 = arith.constant 0 : i32
    %6 = vector.broadcast %c0_i32_2 : i32 to vector<1x8x128xi32>
    %7 = arith.cmpi eq, %3, %6 : vector<1x8x128xi32>
    %8 = arith.andi %5, %7 : vector<1x8x128xi1>
    %cst_3 = arith.constant 0.000000e+00 : f32
    %9 = vector.broadcast %1 : f32 to vector<1x8x128xf32>
    %10 = vector.broadcast %cst_3 : f32 to vector<1x8x128xf32>
    %11 = arith.select %8, %9, %10 : vector<1x8x128xi1>, vector<1x8x128xf32>
    %c0 = arith.constant 0 : index
    %c0_4 = arith.constant 0 : index
    %c0_5 = arith.constant 0 : index
    %12 = vector.load %arg4[%c0, %c0_4, %c0_5] : memref<1x8x128xf32, #tpu.memory_space<vmem>>, vector<1x8x128xf32>
    tpu.vector_store %arg4[%c0, %c0_4, %c0_5], %11 {strides = array<i32>} : memref<1x8x128xf32, #tpu.memory_space<vmem>>, vector<1x8x128xf32>,
    return
  }
  func.func @transform_0(%arg0: i32, %arg1: memref<16xf32, #tpu.memory_space<smem>>) -> (i32, i32) {
    %c0_i32 = arith.constant 0 : i32
    %c0_i32_0 = arith.constant 0 : i32
    return %arg0, %c0_i32 : i32, i32
  }
  func.func @transform_1(%arg0: i32, %arg1: memref<16xf32, #tpu.memory_space<smem>>) -> (i32, i32, i32) {
    %c0_i32 = arith.constant 0 : i32
    %c0_i32_0 = arith.constant 0 : i32
    %c0_i32_1 = arith.constant 0 : i32
    return %arg0, %c0_i32, %c0_i32_0 : i32, i32, i32
  }
  func.func @transform_2(%arg0: i32, %arg1: memref<16xf32, #tpu.memory_space<smem>>) -> (i32, i32, i32) {
    %c0_i32 = arith.constant 0 : i32
    %c0_i32_0 = arith.constant 0 : i32
    %c0_i32_1 = arith.constant 0 : i32
    return %arg0, %c0_i32, %c0_i32_0 : i32, i32, i32
  }
}

</mosaic_0001>

<llo_original>
// kernel: tpu_custom_call.1
$region0: #{tpu_custom_call.1}
  #allocation0 [shape = 'u32[]', space=smem, size = 0x4, offset = 0x4, fixed_abs, tag = 'smem constant byte address 0x4 - core index']
  #allocation1 [shape = 'u32[144,128]{1,0:T(1,128)}', space=vmem, size = 0x12000, scoped, tag = 'internal scratch']
  #allocation2 [shape = 's32[1]{0}', space=sflag, size = 0x4, scoped, tag = 'scoped memory for tpu_custom_call.1']
  #allocation3 [shape = 'u8[512]{0}', space=smem, size = 0x200, scoped, tag = 'prefetched SMEM operand 0']
  %s0 = inlined_call_operand.hbm [shape: f32[16], index: 0, kind: input, shape index: {}]
  %s1 = inlined_call_operand.hbm [shape: f32[16,128], index: 1, kind: input, shape index: {}]
  %s2 = inlined_call_operand.hbm [shape: f32[16,128,128], index: 2, kind: input, shape index: {}]
  %s3 = inlined_call_operand.hbm [shape: f32[2,8,128], index: 3, kind: output, shape index: {}]
  %s4 = sld [smem:[#allocation0]]
  $region56: #{tpu_custom_call.1} parent=0
    _
  %s6 = ssub.s32 1, %s4
  %s7 = scalar_select 0, %s6, %s4
  %9 = dma.hbm_to_smem %s0, 16, [#allocation3], [#allocation2]
  %10 = dma.done [#allocation2], 16
  %11 = sfence
  $region1: #{tpu_custom_call.1} parent=0
    #allocation4 [shape = 'u8[8192]{0}', space=vmem, size = 0x2000, scoped, tag = 'input window, operand 1']
    #allocation5 [shape = 's32[2]{0}', space=sflag, size = 0x8, scoped, tag = 'scoped memory for tpu_custom_call.1']
    #allocation6 [shape = 's32[2]{0}', space=sflag, size = 0x8, scoped, tag = 'scoped memory for tpu_custom_call.1']
    #allocation7 [shape = 'u8[1048576]{0}', space=vmem, size = 0x100000, scoped, tag = 'input window, operand 2']
    #allocation8 [shape = 's32[2]{0}', space=sflag, size = 0x8, scoped, tag = 'scoped memory for tpu_custom_call.1']
    #allocation9 [shape = 'u8[8192]{0}', space=vmem, size = 0x2000, scoped, tag = 'output window, operand 0']
    %12 = vsyncpa [#allocation5], 0
    %s13 = scalar_lea.sflag [#allocation5], 1
    %14 = vsyncpa %s13, 0
    %15 = vsyncpa [#allocation8], 0
    %s16 = scalar_lea.sflag [#allocation8], 1
    %17 = vsyncpa %s16, 0
    %18 = vsyncpa [#allocation6], 0
    %s19 = scalar_lea.sflag [#allocation6], 1
    %20 = vsyncpa %s19, 0
    loop: start=0, step=1, limit=4
    $region2: #{tpu_custom_call.1} parent=1 // loop_pre_header
      _
    $region3: #{tpu_custom_call.1} parent=1 // loop_header
      %s22 = sphi 0, %s26
      %p23 = scmp.ge.s32.totalorder %s22, 4
      %s32 = sphi 0, %s34
      %s35 = sphi 0, %s32
      %s36 = sphi 0, %s35
      %s52 = sphi 0, %s36
      %s58 = sphi 0, %s60
      %s61 = sphi 0, %s58
      %s62 = sphi 0, %s61
      %s78 = sphi 0, %s62
      %s84 = sphi 0, %s86
      %s87 = sphi 0, %s84
      %s88 = sphi 0, %s87
      %s104 = sphi 0, %s88
    $region4: #{tpu_custom_call.1} parent=1 // loop_header_branch
      %25 = sbr.rel (%p23) target = $region8
    $region5: #{tpu_custom_call.1} parent=1 // loop_body
      %s27 = ssub.s32 %s22, 1
      %s28 = ssub.s32 %s22, 2
      %s29 = sadd.s32 %s22, 1
      %s30 = ssub.s32 %s22, %s29
      %p31 = scmp.eq.s32.totalorder %s30, 0
      %s33 = sadd.s32 %s32, 1
      %s34 = scalar_select %p31, %s32, %s33
      %p37 = pneg %p31
      %p38 = scmp.eq.s32.totalorder %s22, 1
      %p39 = por %p37, %p38
      %p40 = scmp.ne.s32.totalorder %s32, %s35
      %p41 = scmp.eq.s32.totalorder %s22, 0
      %p42 = por %p40, %p41
      %p43 = scmp.ne.s32.totalorder %s32, %s35
      %p44 = scmp.eq.s32.totalorder %s27, 1
      %p45 = por %p43, %p44
      %p46 = scmp.ne.s32.totalorder %s35, %s36
      %p47 = scmp.eq.s32.totalorder %s27, 0
      %p48 = por %p46, %p47
      %p49 = scmp.ne.s32.totalorder %s35, %s36
      %p50 = scmp.eq.s32.totalorder %s28, 1
      %p51 = por %p49, %p50
      %p53 = scmp.ne.s32.totalorder %s36, %s52
      %p54 = scmp.eq.s32.totalorder %s28, 0
      %p55 = por %p53, %p54
      %s56 = ssub.s32 %s22, %s29
      %p57 = scmp.eq.s32.totalorder %s56, 0
      %s59 = sadd.s32 %s58, 1
      %s60 = scalar_select %p57, %s58, %s59
      %p63 = pneg %p57
      %p64 = scmp.eq.s32.totalorder %s22, 1
      %p65 = por %p63, %p64
      %p66 = scmp.ne.s32.totalorder %s58, %s61
      %p67 = scmp.eq.s32.totalorder %s22, 0
      %p68 = por %p66, %p67
      %p69 = scmp.ne.s32.totalorder %s58, %s61
      %p70 = scmp.eq.s32.totalorder %s27, 1
      %p71 = por %p69, %p70
      %p72 = scmp.ne.s32.totalorder %s61, %s62
      %p73 = scmp.eq.s32.totalorder %s27, 0
      %p74 = por %p72, %p73
      %p75 = scmp.ne.s32.totalorder %s61, %s62
      %p76 = scmp.eq.s32.totalorder %s28, 1
      %p77 = por %p75, %p76
      %p79 = scmp.ne.s32.totalorder %s62, %s78
      %p80 = scmp.eq.s32.totalorder %s28, 0
      %p81 = por %p79, %p80
      %s82 = ssub.s32 %s22, %s29
      %p83 = scmp.eq.s32.totalorder %s82, 0
      %s85 = sadd.s32 %s84, 1
      %s86 = scalar_select %p83, %s84, %s85
      %p89 = pneg %p83
      %p90 = scmp.eq.s32.totalorder %s22, 1
      %p91 = por %p89, %p90
      %p92 = scmp.ne.s32.totalorder %s84, %s87
      %p93 = scmp.eq.s32.totalorder %s22, 0
      %p94 = por %p92, %p93
      %p95 = scmp.ne.s32.totalorder %s84, %s87
      %p96 = scmp.eq.s32.totalorder %s27, 1
      %p97 = por %p95, %p96
      %p98 = scmp.ne.s32.totalorder %s87, %s88
      %p99 = scmp.eq.s32.totalorder %s27, 0
      %p100 = por %p98, %p99
      %p101 = scmp.ne.s32.totalorder %s87, %s88
      %p102 = scmp.eq.s32.totalorder %s28, 1
      %p103 = por %p101, %p102
      %p105 = scmp.ne.s32.totalorder %s88, %s104
      %p106 = scmp.eq.s32.totalorder %s28, 0
      %p107 = por %p105, %p106
      %p108 = scmp.le.s32.totalorder 1, %s22
      %p109 = scmp.lt.s32.totalorder %s22, 3
      %p110 = pnand %p108, %p109
      %p111 = pneg %p110
      // Predicated region
      $region9: #{tpu_custom_call.1} parent=5 // pred_check
        _
      $region10: #{tpu_custom_call.1} parent=5 // pred_check_branch
        %113 = sbr.rel (%p110) target = $region12
      $region11: #{tpu_custom_call.1} parent=5 // pred_region
        %s114 = ssub.s32 %s22, 1
      $region12: #{tpu_custom_call.1} parent=5 // pred_fallthru
        _
      %p115 = scmp.lt.s32.totalorder %s22, 2
      // Predicated region
      $region13: #{tpu_custom_call.1} parent=5 // pred_check
        %p116 = pneg %p115
      $region14: #{tpu_custom_call.1} parent=5 // pred_check_branch
        %118 = sbr.rel (%p116) target = $region16
      $region15: #{tpu_custom_call.1} parent=5 // pred_region
        // Predicated region
        $region17: #{tpu_custom_call.1} parent=15 // pred_check
          %p119 = pneg %p42
        $region18: #{tpu_custom_call.1} parent=15 // pred_check_branch
          %121 = sbr.rel (%p119) target = $region20
        $region19: #{tpu_custom_call.1} parent=15 // pred_region
          %s122 = sand.u32 %s32, 1
          %s123 = scalar_lea.sflag [#allocation5], %s122
          %s124 = sand.u32 %s32, 1
          %s125 = smul.addr %s124, 8
          %s126 = scalar_lea.vmem [#allocation4], %s125
          %s128 = ssub.s32 128, 128
          %129 = vsyncadd %s123, %s128
          %s130 = smul.addr %s22, 128
          %s131 = scalar_lea.hbm %s1, %s130
          %s133 = sshll.u32 %s126, 4
          %s134 = int_to_ptr.vmem [resolvable:$true] %s133
          %136 = dma.hbm_to_vmem [thread:$0]  %s131, 128, %s134, %s123
        $region20: #{tpu_custom_call.1} parent=15 // pred_fallthru
          _
        // Predicated region
        $region21: #{tpu_custom_call.1} parent=15 // pred_check
          %p137 = pneg %p68
        $region22: #{tpu_custom_call.1} parent=15 // pred_check_branch
          %139 = sbr.rel (%p137) target = $region24
        $region23: #{tpu_custom_call.1} parent=15 // pred_region
          %s140 = sand.u32 %s58, 1
          %s141 = scalar_lea.sflag [#allocation8], %s140
          %s142 = sand.u32 %s58, 1
          %s143 = smul.addr %s142, 1024
          %s144 = scalar_lea.vmem [#allocation7], %s143
          %s145 = smul.u32 8, %s22
          %s147 = ssub.s32 16384, 16384
          %148 = vsyncadd %s141, %s147
          %s149 = smul.addr %s145, 16
          %s150 = smul.addr %s149, 128
          %s151 = scalar_lea.hbm %s2, %s150
          %s152 = sshll.u32 %s144, 4
          %s153 = int_to_ptr.vmem [resolvable:$true] %s152
          %158 = dma.hbm_to_vmem [thread:$0]  %s151, 16384, %s153, %s141, 128, 128, 8
        $region24: #{tpu_custom_call.1} parent=15 // pred_fallthru
          _
      $region16: #{tpu_custom_call.1} parent=5 // pred_fallthru
        _
      %p159 = scmp.le.s32.totalorder 1, %s22
      %p160 = scmp.lt.s32.totalorder %s22, 3
      %p161 = pnand %p159, %p160
      %p162 = pneg %p161
      // Predicated region
      $region25: #{tpu_custom_call.1} parent=5 // pred_check
        _
      $region26: #{tpu_custom_call.1} parent=5 // pred_check_branch
        %164 = sbr.rel (%p161) target = $region28
      $region27: #{tpu_custom_call.1} parent=5 // pred_region
        %s165 = ssub.s32 %s22, 1
        %s166 = sand.u32 %s35, 1
        %s167 = scalar_lea.sflag [#allocation5], %s166
        %s168 = sand.u32 %s35, 1
        %s169 = smul.addr %s168, 8
        %s170 = scalar_lea.vmem [#allocation4], %s169
        // Predicated region
        $region29: #{tpu_custom_call.1} parent=27 // pred_check
          %p171 = pneg %p48
        $region30: #{tpu_custom_call.1} parent=27 // pred_check_branch
          %173 = sbr.rel (%p171) target = $region32
        $region31: #{tpu_custom_call.1} parent=27 // pred_region
          %174 = dma.done %s167, 128
        $region32: #{tpu_custom_call.1} parent=27 // pred_fallthru
          _
        %s175 = sand.u32 %s61, 1
        %s176 = scalar_lea.sflag [#allocation8], %s175
        %s177 = sand.u32 %s61, 1
        %s178 = smul.addr %s177, 1024
        %s179 = scalar_lea.vmem [#allocation7], %s178
        // Predicated region
        $region33: #{tpu_custom_call.1} parent=27 // pred_check
          %p180 = pneg %p74
        $region34: #{tpu_custom_call.1} parent=27 // pred_check_branch
          %182 = sbr.rel (%p180) target = $region36
        $region35: #{tpu_custom_call.1} parent=27 // pred_region
          %183 = dma.done %s176, 16384
        $region36: #{tpu_custom_call.1} parent=27 // pred_fallthru
          _
        %s184 = sand.u32 %s35, 1
        %s185 = scalar_lea.sflag [#allocation5], %s184
        %s186 = sand.u32 %s35, 1
        %s187 = smul.addr %s186, 8
        %s188 = scalar_lea.vmem [#allocation4], %s187
        %p189 = pneg %p48
        %p190 = pneg %p45
        %s191 = sand.u32 %s61, 1
        %s192 = scalar_lea.sflag [#allocation8], %s191
        %s193 = sand.u32 %s61, 1
        %s194 = smul.addr %s193, 1024
        %s195 = scalar_lea.vmem [#allocation7], %s194
        %p196 = pneg %p74
        %p197 = pneg %p71
        %p198 = pneg %p100
        %p199 = pneg %p97
        %s200 = sand.u32 %s87, 1
        %s201 = scalar_lea.sflag [#allocation6], %s200
        %s202 = sand.u32 %s87, 1
        %s203 = smul.addr %s202, 8
        %s204 = scalar_lea.vmem [#allocation9], %s203
        %s205 = smul.u32 8, %s27
        loop: start=0, step=1, limit=8
        $region37: #{tpu_custom_call.1} parent=27 // loop_pre_header
          _
        $region38: #{tpu_custom_call.1} parent=27 // loop_header
          %s207 = sphi 0, %s211
          %p208 = scmp.ge.s32.totalorder %s207, 8
          %s212 = sphi 0.0, %s901
        $region39: #{tpu_custom_call.1} parent=27 // loop_header_branch
          %210 = sbr.rel (%p208) target = $region43
        $region40: #{tpu_custom_call.1} parent=27 // loop_body
          %s213 = scalar_lea.vmem %s170, %s207 [#allocation4]
          %v214 = vld [vmem:[%s213] sm:$0x1]
          %s215 = smul.u32 %s207, 128
          %s216 = scalar_lea.vmem %s179, %s215 [#allocation7]
          %v217 = vld [vmem:[%s216] sm:$0xff]
          %v218 = vld [vmem:[%s216 + $0x8] sm:$0xff]
          %v219 = vld [vmem:[%s216 + $0x10] sm:$0xff]
          %v220 = vld [vmem:[%s216 + $0x18] sm:$0xff]
          %v221 = vld [vmem:[%s216 + $0x20] sm:$0xff]
          %v222 = vld [vmem:[%s216 + $0x28] sm:$0xff]
          %v223 = vld [vmem:[%s216 + $0x30] sm:$0xff]
          %v224 = vld [vmem:[%s216 + $0x38] sm:$0xff]
          %v225 = vld [vmem:[%s216 + $0x40] sm:$0xff]
          %v226 = vld [vmem:[%s216 + $0x48] sm:$0xff]
          %v227 = vld [vmem:[%s216 + $0x50] sm:$0xff]
          %v228 = vld [vmem:[%s216 + $0x58] sm:$0xff]
          %v229 = vld [vmem:[%s216 + $0x60] sm:$0xff]
          %v230 = vld [vmem:[%s216 + $0x68] sm:$0xff]
          %v231 = vld [vmem:[%s216 + $0x70] sm:$0xff]
          %v232 = vld [vmem:[%s216 + $0x78] sm:$0xff]
          %233 = vmatprep.subr.mxu0 0.0
          %v234 = vand.u32 %v217, 4294901760
          %235 = vmatpush1.msra.mxu0 %v234
          %236 = vmatprep.subr.mxu0 0.0
          %v237 = vand.u32 %v218, 4294901760
          %238 = vmatpush1.msra.mxu0 %v237
          %239 = vmatprep.subr.mxu0 0.0
          %v240 = vand.u32 %v219, 4294901760
          %241 = vmatpush1.msra.mxu0 %v240
          %242 = vmatprep.subr.mxu0 0.0
          %v243 = vand.u32 %v220, 4294901760
          %244 = vmatpush1.msra.mxu0 %v243
          %245 = vmatprep.subr.mxu0 0.0
          %v246 = vand.u32 %v221, 4294901760
          %247 = vmatpush1.msra.mxu0 %v246
          %248 = vmatprep.subr.mxu0 0.0
          %v249 = vand.u32 %v222, 4294901760
          %250 = vmatpush1.msra.mxu0 %v249
          %251 = vmatprep.subr.mxu0 0.0
          %v252 = vand.u32 %v223, 4294901760
          %253 = vmatpush1.msra.mxu0 %v252
          %254 = vmatprep.subr.mxu0 0.0
          %v255 = vand.u32 %v224, 4294901760
          %256 = vmatpush1.msra.mxu0 %v255
          %257 = vmatprep.subr.mxu0 0.0
          %v258 = vand.u32 %v225, 4294901760
          %259 = vmatpush1.msra.mxu0 %v258
          %260 = vmatprep.subr.mxu0 0.0
          %v261 = vand.u32 %v226, 4294901760
          %262 = vmatpush1.msra.mxu0 %v261
          %263 = vmatprep.subr.mxu0 0.0
          %v264 = vand.u32 %v227, 4294901760
          %265 = vmatpush1.msra.mxu0 %v264
          %266 = vmatprep.subr.mxu0 0.0
          %v267 = vand.u32 %v228, 4294901760
          %268 = vmatpush1.msra.mxu0 %v267
          %269 = vmatprep.subr.mxu0 0.0
          %v270 = vand.u32 %v229, 4294901760
          %271 = vmatpush1.msra.mxu0 %v270
          %272 = vmatprep.subr.mxu0 0.0
          %v273 = vand.u32 %v230, 4294901760
          %274 = vmatpush1.msra.mxu0 %v273
          %275 = vmatprep.subr.mxu0 0.0
          %v276 = vand.u32 %v231, 4294901760
          %277 = vmatpush1.msra.mxu0 %v276
          %278 = vmatprep.subr.mxu0 0.0
          %v279 = vand.u32 %v232, 4294901760
          %280 = vmatpush1.msra.mxu0 %v279
          %281 = vmatprep.subr.mxu0 0.0
          %282 = vmatpush1.msra.mxu0 0.0
          %283 = vmatprep.subr.mxu0 0.0
          %284 = vmatpush1.msra.mxu0 0.0
          %285 = vmatprep.subr.mxu0 0.0
          %286 = vmatpush1.msra.mxu0 0.0
          %287 = vmatprep.subr.mxu0 0.0
          %288 = vmatpush1.msra.mxu0 0.0
          %289 = vmatprep.subr.mxu0 0.0
          %290 = vmatpush1.msra.mxu0 0.0
          %291 = vmatprep.subr.mxu0 0.0
          %292 = vmatpush1.msra.mxu0 0.0
          %293 = vmatprep.subr.mxu0 0.0
          %294 = vmatpush1.msra.mxu0 0.0
          %295 = vmatprep.subr.mxu0 0.0
          %296 = vmatpush1.msra.mxu0 0.0
          %297 = vmatprep.subr.mxu0 0.0
          %298 = vmatpush1.msra.mxu0 0.0
          %299 = vmatprep.subr.mxu0 0.0
          %300 = vmatpush1.msra.mxu0 0.0
          %301 = vmatprep.subr.mxu0 0.0
          %302 = vmatpush1.msra.mxu0 0.0
          %303 = vmatprep.subr.mxu0 0.0
          %304 = vmatpush1.msra.mxu0 0.0
          %305 = vmatprep.subr.mxu0 0.0
          %306 = vmatpush1.msra.mxu0 0.0
          %307 = vmatprep.subr.mxu0 0.0
          %308 = vmatpush1.msra.mxu0 0.0
          %309 = vmatprep.subr.mxu0 0.0
          %310 = vmatpush1.msra.mxu0 0.0
          %311 = vmatprep.subr.mxu0 0.0
          %312 = vmatpush1.msra.mxu0 0.0
          %313 = vmatprep.mubr.f32.mxu0 0.0
          %v314 = vand.u32 %v214, 4294901760
          %v315 = vsub.f32 %v214, %v314
          %v316 = vand.u32 %v315, 4294901760
          %v317 = vsub.f32 %v315, %v316
          %v318 = vand.u32 %v317, 4294901760
          %319 = vmatmul.mubr.f32.gmra.mrb[0].mxu0 %v318
          %v320 = vpop.f32.mrb[0].mxu0
          %v321 = vadd.f32 0.0, %v320
          %v322 = vpop.f32.mrb[0].mxu0
          %323 = vdwg.mxu0
          %324 = vmatprep.subr.mxu0 0.0
          %v325 = vand.u32 %v217, 4294901760
          %v326 = vsub.f32 %v217, %v325
          %v327 = vand.u32 %v326, 4294901760
          %v328 = vsub.f32 %v326, %v327
          %v329 = vand.u32 %v328, 4294901760
          %330 = vmatpush1.msra.mxu0 %v329
          %331 = vmatprep.subr.mxu0 0.0
          %v332 = vand.u32 %v218, 4294901760
          %v333 = vsub.f32 %v218, %v332
          %v334 = vand.u32 %v333, 4294901760
          %v335 = vsub.f32 %v333, %v334
          %v336 = vand.u32 %v335, 4294901760
          %337 = vmatpush1.msra.mxu0 %v336
          %338 = vmatprep.subr.mxu0 0.0
          %v339 = vand.u32 %v219, 4294901760
          %v340 = vsub.f32 %v219, %v339
          %v341 = vand.u32 %v340, 4294901760
          %v342 = vsub.f32 %v340, %v341
          %v343 = vand.u32 %v342, 4294901760
          %344 = vmatpush1.msra.mxu0 %v343
          %345 = vmatprep.subr.mxu0 0.0
          %v346 = vand.u32 %v220, 4294901760
          %v347 = vsub.f32 %v220, %v346
          %v348 = vand.u32 %v347, 4294901760
          %v349 = vsub.f32 %v347, %v348
          %v350 = vand.u32 %v349, 4294901760
          %351 = vmatpush1.msra.mxu0 %v350
          %352 = vmatprep.subr.mxu0 0.0
          %v353 = vand.u32 %v221, 4294901760
          %v354 = vsub.f32 %v221, %v353
          %v355 = vand.u32 %v354, 4294901760
          %v356 = vsub.f32 %v354, %v355
          %v357 = vand.u32 %v356, 4294901760
          %358 = vmatpush1.msra.mxu0 %v357
          %359 = vmatprep.subr.mxu0 0.0
          %v360 = vand.u32 %v222, 4294901760
          %v361 = vsub.f32 %v222, %v360
          %v362 = vand.u32 %v361, 4294901760
          %v363 = vsub.f32 %v361, %v362
          %v364 = vand.u32 %v363, 4294901760
          %365 = vmatpush1.msra.mxu0 %v364
          %366 = vmatprep.subr.mxu0 0.0
          %v367 = vand.u32 %v223, 4294901760
          %v368 = vsub.f32 %v223, %v367
          %v369 = vand.u32 %v368, 4294901760
          %v370 = vsub.f32 %v368, %v369
          %v371 = vand.u32 %v370, 4294901760
          %372 = vmatpush1.msra.mxu0 %v371
          %373 = vmatprep.subr.mxu0 0.0
          %v374 = vand.u32 %v224, 4294901760
          %v375 = vsub.f32 %v224, %v374
          %v376 = vand.u32 %v375, 4294901760
          %v377 = vsub.f32 %v375, %v376
          %v378 = vand.u32 %v377, 4294901760
          %379 = vmatpush1.msra.mxu0 %v378
          %380 = vmatprep.subr.mxu0 0.0
          %v381 = vand.u32 %v225, 4294901760
          %v382 = vsub.f32 %v225, %v381
          %v383 = vand.u32 %v382, 4294901760
          %v384 = vsub.f32 %v382, %v383
          %v385 = vand.u32 %v384, 4294901760
          %386 = vmatpush1.msra.mxu0 %v385
          %387 = vmatprep.subr.mxu0 0.0
          %v388 = vand.u32 %v226, 4294901760
          %v389 = vsub.f32 %v226, %v388
          %v390 = vand.u32 %v389, 4294901760
          %v391 = vsub.f32 %v389, %v390
          %v392 = vand.u32 %v391, 4294901760
          %393 = vmatpush1.msra.mxu0 %v392
          %394 = vmatprep.subr.mxu0 0.0
          %v395 = vand.u32 %v227, 4294901760
          %v396 = vsub.f32 %v227, %v395
          %v397 = vand.u32 %v396, 4294901760
          %v398 = vsub.f32 %v396, %v397
          %v399 = vand.u32 %v398, 4294901760
          %400 = vmatpush1.msra.mxu0 %v399
          %401 = vmatprep.subr.mxu0 0.0
          %v402 = vand.u32 %v228, 4294901760
          %v403 = vsub.f32 %v228, %v402
          %v404 = vand.u32 %v403, 4294901760
          %v405 = vsub.f32 %v403, %v404
          %v406 = vand.u32 %v405, 4294901760
          %407 = vmatpush1.msra.mxu0 %v406
          %408 = vmatprep.subr.mxu0 0.0
          %v409 = vand.u32 %v229, 4294901760
          %v410 = vsub.f32 %v229, %v409
          %v411 = vand.u32 %v410, 4294901760
          %v412 = vsub.f32 %v410, %v411
          %v413 = vand.u32 %v412, 4294901760
          %414 = vmatpush1.msra.mxu0 %v413
          %415 = vmatprep.subr.mxu0 0.0
          %v416 = vand.u32 %v230, 4294901760
          %v417 = vsub.f32 %v230, %v416
          %v418 = vand.u32 %v417, 4294901760
          %v419 = vsub.f32 %v417, %v418
          %v420 = vand.u32 %v419, 4294901760
          %421 = vmatpush1.msra.mxu0 %v420
          %422 = vmatprep.subr.mxu0 0.0
          %v423 = vand.u32 %v231, 4294901760
          %v424 = vsub.f32 %v231, %v423
          %v425 = vand.u32 %v424, 4294901760
          %v426 = vsub.f32 %v424, %v425
          %v427 = vand.u32 %v426, 4294901760
          %428 = vmatpush1.msra.mxu0 %v427
          %429 = vmatprep.subr.mxu0 0.0
          %v430 = vand.u32 %v232, 4294901760
          %v431 = vsub.f32 %v232, %v430
          %v432 = vand.u32 %v431, 4294901760
          %v433 = vsub.f32 %v431, %v432
          %v434 = vand.u32 %v433, 4294901760
          %435 = vmatpush1.msra.mxu0 %v434
          %436 = vmatprep.subr.mxu0 0.0
          %437 = vmatpush1.msra.mxu0 0.0
          %438 = vmatprep.subr.mxu0 0.0
          %439 = vmatpush1.msra.mxu0 0.0
          %440 = vmatprep.subr.mxu0 0.0
          %441 = vmatpush1.msra.mxu0 0.0
          %442 = vmatprep.subr.mxu0 0.0
          %443 = vmatpush1.msra.mxu0 0.0
          %444 = vmatprep.subr.mxu0 0.0
          %445 = vmatpush1.msra.mxu0 0.0
          %446 = vmatprep.subr.mxu0 0.0
          %447 = vmatpush1.msra.mxu0 0.0
          %448 = vmatprep.subr.mxu0 0.0
          %449 = vmatpush1.msra.mxu0 0.0
          %450 = vmatprep.subr.mxu0 0.0
          %451 = vmatpush1.msra.mxu0 0.0
          %452 = vmatprep.subr.mxu0 0.0
          %453 = vmatpush1.msra.mxu0 0.0
          %454 = vmatprep.subr.mxu0 0.0
          %455 = vmatpush1.msra.mxu0 0.0
          %456 = vmatprep.subr.mxu0 0.0
          %457 = vmatpush1.msra.mxu0 0.0
          %458 = vmatprep.subr.mxu0 0.0
          %459 = vmatpush1.msra.mxu0 0.0
          %460 = vmatprep.subr.mxu0 0.0
          %461 = vmatpush1.msra.mxu0 0.0
          %462 = vmatprep.subr.mxu0 0.0
          %463 = vmatpush1.msra.mxu0 0.0
          %464 = vmatprep.subr.mxu0 0.0
          %465 = vmatpush1.msra.mxu0 0.0
          %466 = vmatprep.subr.mxu0 0.0
          %467 = vmatpush1.msra.mxu0 0.0
          %468 = vmatprep.mubr.f32.mxu0 0.0
          %v469 = vand.u32 %v214, 4294901760
          %470 = vmatmul.mubr.f32.gmra.mrb[0].mxu0 %v469
          %v471 = vpop.f32.mrb[0].mxu0
          %v472 = vadd.f32 %v321, %v471
          %v473 = vpop.f32.mrb[0].mxu0
          %474 = vdwg.mxu0
          %475 = vmatprep.subr.mxu0 0.0
          %v476 = vand.u32 %v217, 4294901760
          %v477 = vsub.f32 %v217, %v476
          %478 = vmatpush1.msra.mxu0 %v477
          %479 = vmatprep.subr.mxu0 0.0
          %v480 = vand.u32 %v218, 4294901760
          %v481 = vsub.f32 %v218, %v480
          %482 = vmatpush1.msra.mxu0 %v481
          %483 = vmatprep.subr.mxu0 0.0
          %v484 = vand.u32 %v219, 4294901760
          %v485 = vsub.f32 %v219, %v484
          %486 = vmatpush1.msra.mxu0 %v485
          %487 = vmatprep.subr.mxu0 0.0
          %v488 = vand.u32 %v220, 4294901760
          %v489 = vsub.f32 %v220, %v488
          %490 = vmatpush1.msra.mxu0 %v489
          %491 = vmatprep.subr.mxu0 0.0
          %v492 = vand.u32 %v221, 4294901760
          %v493 = vsub.f32 %v221, %v492
          %494 = vmatpush1.msra.mxu0 %v493
          %495 = vmatprep.subr.mxu0 0.0
          %v496 = vand.u32 %v222, 4294901760
          %v497 = vsub.f32 %v222, %v496
          %498 = vmatpush1.msra.mxu0 %v497
          %499 = vmatprep.subr.mxu0 0.0
          %v500 = vand.u32 %v223, 4294901760
          %v501 = vsub.f32 %v223, %v500
          %502 = vmatpush1.msra.mxu0 %v501
          %503 = vmatprep.subr.mxu0 0.0
          %v504 = vand.u32 %v224, 4294901760
          %v505 = vsub.f32 %v224, %v504
          %506 = vmatpush1.msra.mxu0 %v505
          %507 = vmatprep.subr.mxu0 0.0
          %v508 = vand.u32 %v225, 4294901760
          %v509 = vsub.f32 %v225, %v508
          %510 = vmatpush1.msra.mxu0 %v509
          %511 = vmatprep.subr.mxu0 0.0
          %v512 = vand.u32 %v226, 4294901760
          %v513 = vsub.f32 %v226, %v512
          %514 = vmatpush1.msra.mxu0 %v513
          %515 = vmatprep.subr.mxu0 0.0
          %v516 = vand.u32 %v227, 4294901760
          %v517 = vsub.f32 %v227, %v516
          %518 = vmatpush1.msra.mxu0 %v517
          %519 = vmatprep.subr.mxu0 0.0
          %v520 = vand.u32 %v228, 4294901760
          %v521 = vsub.f32 %v228, %v520
          %522 = vmatpush1.msra.mxu0 %v521
          %523 = vmatprep.subr.mxu0 0.0
          %v524 = vand.u32 %v229, 4294901760
          %v525 = vsub.f32 %v229, %v524
          %526 = vmatpush1.msra.mxu0 %v525
          %527 = vmatprep.subr.mxu0 0.0
          %v528 = vand.u32 %v230, 4294901760
          %v529 = vsub.f32 %v230, %v528
          %530 = vmatpush1.msra.mxu0 %v529
          %531 = vmatprep.subr.mxu0 0.0
          %v532 = vand.u32 %v231, 4294901760
          %v533 = vsub.f32 %v231, %v532
          %534 = vmatpush1.msra.mxu0 %v533
          %535 = vmatprep.subr.mxu0 0.0
          %v536 = vand.u32 %v232, 4294901760
          %v537 = vsub.f32 %v232, %v536
          %538 = vmatpush1.msra.mxu0 %v537
          %539 = vmatprep.subr.mxu0 0.0
          %540 = vmatpush1.msra.mxu0 0.0
          %541 = vmatprep.subr.mxu0 0.0
          %542 = vmatpush1.msra.mxu0 0.0
          %543 = vmatprep.subr.mxu0 0.0
          %544 = vmatpush1.msra.mxu0 0.0
          %545 = vmatprep.subr.mxu0 0.0
          %546 = vmatpush1.msra.mxu0 0.0
          %547 = vmatprep.subr.mxu0 0.0
          %548 = vmatpush1.msra.mxu0 0.0
          %549 = vmatprep.subr.mxu0 0.0
          %550 = vmatpush1.msra.mxu0 0.0
          %551 = vmatprep.subr.mxu0 0.0
          %552 = vmatpush1.msra.mxu0 0.0
          %553 = vmatprep.subr.mxu0 0.0
          %554 = vmatpush1.msra.mxu0 0.0
          %555 = vmatprep.subr.mxu0 0.0
          %556 = vmatpush1.msra.mxu0 0.0
          %557 = vmatprep.subr.mxu0 0.0
          %558 = vmatpush1.msra.mxu0 0.0
          %559 = vmatprep.subr.mxu0 0.0
          %560 = vmatpush1.msra.mxu0 0.0
          %561 = vmatprep.subr.mxu0 0.0
          %562 = vmatpush1.msra.mxu0 0.0
          %563 = vmatprep.subr.mxu0 0.0
          %564 = vmatpush1.msra.mxu0 0.0
          %565 = vmatprep.subr.mxu0 0.0
          %566 = vmatpush1.msra.mxu0 0.0
          %567 = vmatprep.subr.mxu0 0.0
          %568 = vmatpush1.msra.mxu0 0.0
          %569 = vmatprep.subr.mxu0 0.0
          %570 = vmatpush1.msra.mxu0 0.0
          %571 = vmatprep.mubr.f32.mxu0 0.0
          %v572 = vand.u32 %v214, 4294901760
          %v573 = vsub.f32 %v214, %v572
          %574 = vmatmul.mubr.f32.gmra.mrb[0].mxu0 %v573
          %v575 = vpop.f32.mrb[0].mxu0
          %v576 = vadd.f32 %v472, %v575
          %v577 = vpop.f32.mrb[0].mxu0
          %578 = vdwg.mxu0
          %579 = vmatprep.subr.mxu0 0.0
          %v580 = vand.u32 %v217, 4294901760
          %581 = vmatpush1.msra.mxu0 %v580
          %582 = vmatprep.subr.mxu0 0.0
          %v583 = vand.u32 %v218, 4294901760
          %584 = vmatpush1.msra.mxu0 %v583
          %585 = vmatprep.subr.mxu0 0.0
          %v586 = vand.u32 %v219, 4294901760
          %587 = vmatpush1.msra.mxu0 %v586
          %588 = vmatprep.subr.mxu0 0.0
          %v589 = vand.u32 %v220, 4294901760
          %590 = vmatpush1.msra.mxu0 %v589
          %591 = vmatprep.subr.mxu0 0.0
          %v592 = vand.u32 %v221, 4294901760
          %593 = vmatpush1.msra.mxu0 %v592
          %594 = vmatprep.subr.mxu0 0.0
          %v595 = vand.u32 %v222, 4294901760
          %596 = vmatpush1.msra.mxu0 %v595
          %597 = vmatprep.subr.mxu0 0.0
          %v598 = vand.u32 %v223, 4294901760
          %599 = vmatpush1.msra.mxu0 %v598
          %600 = vmatprep.subr.mxu0 0.0
          %v601 = vand.u32 %v224, 4294901760
          %602 = vmatpush1.msra.mxu0 %v601
          %603 = vmatprep.subr.mxu0 0.0
          %v604 = vand.u32 %v225, 4294901760
          %605 = vmatpush1.msra.mxu0 %v604
          %606 = vmatprep.subr.mxu0 0.0
          %v607 = vand.u32 %v226, 4294901760
          %608 = vmatpush1.msra.mxu0 %v607
          %609 = vmatprep.subr.mxu0 0.0
          %v610 = vand.u32 %v227, 4294901760
          %611 = vmatpush1.msra.mxu0 %v610
          %612 = vmatprep.subr.mxu0 0.0
          %v613 = vand.u32 %v228, 4294901760
          %614 = vmatpush1.msra.mxu0 %v613
          %615 = vmatprep.subr.mxu0 0.0
          %v616 = vand.u32 %v229, 4294901760
          %617 = vmatpush1.msra.mxu0 %v616
          %618 = vmatprep.subr.mxu0 0.0
          %v619 = vand.u32 %v230, 4294901760
          %620 = vmatpush1.msra.mxu0 %v619
          %621 = vmatprep.subr.mxu0 0.0
          %v622 = vand.u32 %v231, 4294901760
          %623 = vmatpush1.msra.mxu0 %v622
          %624 = vmatprep.subr.mxu0 0.0
          %v625 = vand.u32 %v232, 4294901760
          %626 = vmatpush1.msra.mxu0 %v625
          %627 = vmatprep.subr.mxu0 0.0
          %628 = vmatpush1.msra.mxu0 0.0
          %629 = vmatprep.subr.mxu0 0.0
          %630 = vmatpush1.msra.mxu0 0.0
          %631 = vmatprep.subr.mxu0 0.0
          %632 = vmatpush1.msra.mxu0 0.0
          %633 = vmatprep.subr.mxu0 0.0
          %634 = vmatpush1.msra.mxu0 0.0
          %635 = vmatprep.subr.mxu0 0.0
          %636 = vmatpush1.msra.mxu0 0.0
          %637 = vmatprep.subr.mxu0 0.0
          %638 = vmatpush1.msra.mxu0 0.0
          %639 = vmatprep.subr.mxu0 0.0
          %640 = vmatpush1.msra.mxu0 0.0
          %641 = vmatprep.subr.mxu0 0.0
          %642 = vmatpush1.msra.mxu0 0.0
          %643 = vmatprep.subr.mxu0 0.0
          %644 = vmatpush1.msra.mxu0 0.0
          %645 = vmatprep.subr.mxu0 0.0
          %646 = vmatpush1.msra.mxu0 0.0
          %647 = vmatprep.subr.mxu0 0.0
          %648 = vmatpush1.msra.mxu0 0.0
          %649 = vmatprep.subr.mxu0 0.0
          %650 = vmatpush1.msra.mxu0 0.0
          %651 = vmatprep.subr.mxu0 0.0
          %652 = vmatpush1.msra.mxu0 0.0
          %653 = vmatprep.subr.mxu0 0.0
          %654 = vmatpush1.msra.mxu0 0.0
          %655 = vmatprep.subr.mxu0 0.0
          %656 = vmatpush1.msra.mxu0 0.0
          %657 = vmatprep.subr.mxu0 0.0
          %658 = vmatpush1.msra.mxu0 0.0
          %659 = vmatprep.mubr.f32.mxu0 0.0
          %v660 = vand.u32 %v214, 4294901760
          %v661 = vsub.f32 %v214, %v660
          %v662 = vand.u32 %v661, 4294901760
          %663 = vmatmul.mubr.f32.gmra.mrb[0].mxu0 %v662
          %v664 = vpop.f32.mrb[0].mxu0
          %v665 = vadd.f32 %v576, %v664
          %v666 = vpop.f32.mrb[0].mxu0
          %667 = vdwg.mxu0
          %668 = vmatprep.subr.mxu0 0.0
          %v669 = vand.u32 %v217, 4294901760
          %v670 = vsub.f32 %v217, %v669
          %v671 = vand.u32 %v670, 4294901760
          %672 = vmatpush1.msra.mxu0 %v671
          %673 = vmatprep.subr.mxu0 0.0
          %v674 = vand.u32 %v218, 4294901760
          %v675 = vsub.f32 %v218, %v674
          %v676 = vand.u32 %v675, 4294901760
          %677 = vmatpush1.msra.mxu0 %v676
          %678 = vmatprep.subr.mxu0 0.0
          %v679 = vand.u32 %v219, 4294901760
          %v680 = vsub.f32 %v219, %v679
          %v681 = vand.u32 %v680, 4294901760
          %682 = vmatpush1.msra.mxu0 %v681
          %683 = vmatprep.subr.mxu0 0.0
          %v684 = vand.u32 %v220, 4294901760
          %v685 = vsub.f32 %v220, %v684
          %v686 = vand.u32 %v685, 4294901760
          %687 = vmatpush1.msra.mxu0 %v686
          %688 = vmatprep.subr.mxu0 0.0
          %v689 = vand.u32 %v221, 4294901760
          %v690 = vsub.f32 %v221, %v689
          %v691 = vand.u32 %v690, 4294901760
          %692 = vmatpush1.msra.mxu0 %v691
          %693 = vmatprep.subr.mxu0 0.0
          %v694 = vand.u32 %v222, 4294901760
          %v695 = vsub.f32 %v222, %v694
          %v696 = vand.u32 %v695, 4294901760
          %697 = vmatpush1.msra.mxu0 %v696
          %698 = vmatprep.subr.mxu0 0.0
          %v699 = vand.u32 %v223, 4294901760
          %v700 = vsub.f32 %v223, %v699
          %v701 = vand.u32 %v700, 4294901760
          %702 = vmatpush1.msra.mxu0 %v701
          %703 = vmatprep.subr.mxu0 0.0
          %v704 = vand.u32 %v224, 4294901760
          %v705 = vsub.f32 %v224, %v704
          %v706 = vand.u32 %v705, 4294901760
          %707 = vmatpush1.msra.mxu0 %v706
          %708 = vmatprep.subr.mxu0 0.0
          %v709 = vand.u32 %v225, 4294901760
          %v710 = vsub.f32 %v225, %v709
          %v711 = vand.u32 %v710, 4294901760
          %712 = vmatpush1.msra.mxu0 %v711
          %713 = vmatprep.subr.mxu0 0.0
          %v714 = vand.u32 %v226, 4294901760
          %v715 = vsub.f32 %v226, %v714
          %v716 = vand.u32 %v715, 4294901760
          %717 = vmatpush1.msra.mxu0 %v716
          %718 = vmatprep.subr.mxu0 0.0
          %v719 = vand.u32 %v227, 4294901760
          %v720 = vsub.f32 %v227, %v719
          %v721 = vand.u32 %v720, 4294901760
          %722 = vmatpush1.msra.mxu0 %v721
          %723 = vmatprep.subr.mxu0 0.0
          %v724 = vand.u32 %v228, 4294901760
          %v725 = vsub.f32 %v228, %v724
          %v726 = vand.u32 %v725, 4294901760
          %727 = vmatpush1.msra.mxu0 %v726
          %728 = vmatprep.subr.mxu0 0.0
          %v729 = vand.u32 %v229, 4294901760
          %v730 = vsub.f32 %v229, %v729
          %v731 = vand.u32 %v730, 4294901760
          %732 = vmatpush1.msra.mxu0 %v731
          %733 = vmatprep.subr.mxu0 0.0
          %v734 = vand.u32 %v230, 4294901760
          %v735 = vsub.f32 %v230, %v734
          %v736 = vand.u32 %v735, 4294901760
          %737 = vmatpush1.msra.mxu0 %v736
          %738 = vmatprep.subr.mxu0 0.0
          %v739 = vand.u32 %v231, 4294901760
          %v740 = vsub.f32 %v231, %v739
          %v741 = vand.u32 %v740, 4294901760
          %742 = vmatpush1.msra.mxu0 %v741
          %743 = vmatprep.subr.mxu0 0.0
          %v744 = vand.u32 %v232, 4294901760
          %v745 = vsub.f32 %v232, %v744
          %v746 = vand.u32 %v745, 4294901760
          %747 = vmatpush1.msra.mxu0 %v746
          %748 = vmatprep.subr.mxu0 0.0
          %749 = vmatpush1.msra.mxu0 0.0
          %750 = vmatprep.subr.mxu0 0.0
          %751 = vmatpush1.msra.mxu0 0.0
          %752 = vmatprep.subr.mxu0 0.0
          %753 = vmatpush1.msra.mxu0 0.0
          %754 = vmatprep.subr.mxu0 0.0
          %755 = vmatpush1.msra.mxu0 0.0
          %756 = vmatprep.subr.mxu0 0.0
          %757 = vmatpush1.msra.mxu0 0.0
          %758 = vmatprep.subr.mxu0 0.0
          %759 = vmatpush1.msra.mxu0 0.0
          %760 = vmatprep.subr.mxu0 0.0
          %761 = vmatpush1.msra.mxu0 0.0
          %762 = vmatprep.subr.mxu0 0.0
          %763 = vmatpush1.msra.mxu0 0.0
          %764 = vmatprep.subr.mxu0 0.0
          %765 = vmatpush1.msra.mxu0 0.0
          %766 = vmatprep.subr.mxu0 0.0
          %767 = vmatpush1.msra.mxu0 0.0
          %768 = vmatprep.subr.mxu0 0.0
          %769 = vmatpush1.msra.mxu0 0.0
          %770 = vmatprep.subr.mxu0 0.0
          %771 = vmatpush1.msra.mxu0 0.0
          %772 = vmatprep.subr.mxu0 0.0
          %773 = vmatpush1.msra.mxu0 0.0
          %774 = vmatprep.subr.mxu0 0.0
          %775 = vmatpush1.msra.mxu0 0.0
          %776 = vmatprep.subr.mxu0 0.0
          %777 = vmatpush1.msra.mxu0 0.0
          %778 = vmatprep.subr.mxu0 0.0
          %779 = vmatpush1.msra.mxu0 0.0
          %780 = vmatprep.mubr.f32.mxu0 0.0
          %v781 = vand.u32 %v214, 4294901760
          %782 = vmatmul.mubr.f32.gmra.mrb[0].mxu0 %v781
          %v783 = vpop.f32.mrb[0].mxu0
          %v784 = vadd.f32 %v665, %v783
          %v785 = vpop.f32.mrb[0].mxu0
          %786 = vdwg.mxu0
          %787 = vmatprep.subr.mxu0 0.0
          %v788 = vand.u32 %v217, 4294901760
          %789 = vmatpush1.msra.mxu0 %v788
          %790 = vmatprep.subr.mxu0 0.0
          %v791 = vand.u32 %v218, 4294901760
          %792 = vmatpush1.msra.mxu0 %v791
          %793 = vmatprep.subr.mxu0 0.0
          %v794 = vand.u32 %v219, 4294901760
          %795 = vmatpush1.msra.mxu0 %v794
          %796 = vmatprep.subr.mxu0 0.0
          %v797 = vand.u32 %v220, 4294901760
          %798 = vmatpush1.msra.mxu0 %v797
          %799 = vmatprep.subr.mxu0 0.0
          %v800 = vand.u32 %v221, 4294901760
          %801 = vmatpush1.msra.mxu0 %v800
          %802 = vmatprep.subr.mxu0 0.0
          %v803 = vand.u32 %v222, 4294901760
          %804 = vmatpush1.msra.mxu0 %v803
          %805 = vmatprep.subr.mxu0 0.0
          %v806 = vand.u32 %v223, 4294901760
          %807 = vmatpush1.msra.mxu0 %v806
          %808 = vmatprep.subr.mxu0 0.0
          %v809 = vand.u32 %v224, 4294901760
          %810 = vmatpush1.msra.mxu0 %v809
          %811 = vmatprep.subr.mxu0 0.0
          %v812 = vand.u32 %v225, 4294901760
          %813 = vmatpush1.msra.mxu0 %v812
          %814 = vmatprep.subr.mxu0 0.0
          %v815 = vand.u32 %v226, 4294901760
          %816 = vmatpush1.msra.mxu0 %v815
          %817 = vmatprep.subr.mxu0 0.0
          %v818 = vand.u32 %v227, 4294901760
          %819 = vmatpush1.msra.mxu0 %v818
          %820 = vmatprep.subr.mxu0 0.0
          %v821 = vand.u32 %v228, 4294901760
          %822 = vmatpush1.msra.mxu0 %v821
          %823 = vmatprep.subr.mxu0 0.0
          %v824 = vand.u32 %v229, 4294901760
          %825 = vmatpush1.msra.mxu0 %v824
          %826 = vmatprep.subr.mxu0 0.0
          %v827 = vand.u32 %v230, 4294901760
          %828 = vmatpush1.msra.mxu0 %v827
          %829 = vmatprep.subr.mxu0 0.0
          %v830 = vand.u32 %v231, 4294901760
          %831 = vmatpush1.msra.mxu0 %v830
          %832 = vmatprep.subr.mxu0 0.0
          %v833 = vand.u32 %v232, 4294901760
          %834 = vmatpush1.msra.mxu0 %v833
          %835 = vmatprep.subr.mxu0 0.0
          %836 = vmatpush1.msra.mxu0 0.0
          %837 = vmatprep.subr.mxu0 0.0
          %838 = vmatpush1.msra.mxu0 0.0
          %839 = vmatprep.subr.mxu0 0.0
          %840 = vmatpush1.msra.mxu0 0.0
          %841 = vmatprep.subr.mxu0 0.0
          %842 = vmatpush1.msra.mxu0 0.0
          %843 = vmatprep.subr.mxu0 0.0
          %844 = vmatpush1.msra.mxu0 0.0
          %845 = vmatprep.subr.mxu0 0.0
          %846 = vmatpush1.msra.mxu0 0.0
          %847 = vmatprep.subr.mxu0 0.0
          %848 = vmatpush1.msra.mxu0 0.0
          %849 = vmatprep.subr.mxu0 0.0
          %850 = vmatpush1.msra.mxu0 0.0
          %851 = vmatprep.subr.mxu0 0.0
          %852 = vmatpush1.msra.mxu0 0.0
          %853 = vmatprep.subr.mxu0 0.0
          %854 = vmatpush1.msra.mxu0 0.0
          %855 = vmatprep.subr.mxu0 0.0
          %856 = vmatpush1.msra.mxu0 0.0
          %857 = vmatprep.subr.mxu0 0.0
          %858 = vmatpush1.msra.mxu0 0.0
          %859 = vmatprep.subr.mxu0 0.0
          %860 = vmatpush1.msra.mxu0 0.0
          %861 = vmatprep.subr.mxu0 0.0
          %862 = vmatpush1.msra.mxu0 0.0
          %863 = vmatprep.subr.mxu0 0.0
          %864 = vmatpush1.msra.mxu0 0.0
          %865 = vmatprep.subr.mxu0 0.0
          %866 = vmatpush1.msra.mxu0 0.0
          %867 = vmatprep.mubr.f32.mxu0 0.0
          %v868 = vand.u32 %v214, 4294901760
          %869 = vmatmul.mubr.f32.gmra.mrb[0].mxu0 %v868
          %v870 = vpop.f32.mrb[0].mxu0
          %v871 = vadd.f32 %v784, %v870
          %v872 = vpop.f32.mrb[0].mxu0
          %873 = vdwg.mxu0
          %v874 = vmul.f32 %v871, %v214
          %vm875 = vcmask 1040384
          %v876 = vsel %vm875, %v874, 0.0
          %877 = vadd.xlane.f32.xlu0 %v876
          %v878 = vpop.xlane.xlu0 %877
          %v879 = vrot.slane %v878, 4
          %v880 = vadd.f32 %v878, %v879
          %v881 = vrot.slane %v880, 2
          %v882 = vadd.f32 %v880, %v881
          %v883 = vrot.slane %v882, 1
          %v884 = vadd.f32 %v882, %v883
          %s885 = vtos %v884
          %s886 = sadd.f32 %s885, 1e-08
          %v887 = vstv %s886
          %v888 = vrsqrt.pop %v887
          %v889 = vmul.f32 %v887, %v888
          %vm890 = vcmp.eq.f32.partialorder %v887, inf
          %v891 = vsel %vm890, %v887, %v889
          %vm892 = vcmp.eq.f32.partialorder %v887, 0.0
          %v893 = vand.u32 %v887, 2147483648
          %v894 = vsel %vm892, %v893, %v891
          %s895 = vtos %v894
          %s896 = smul.u32 %s27, 8
          %s897 = sadd.s32 %s896, %s207
          %s898 = sld [smem:[#allocation3 + %s897]]
          %s899 = ssub.f32 %s895, %s898
          %s900 = smul.f32 %s899, %s899
          %s901 = sadd.f32 %s212, %s900
        $region41: #{tpu_custom_call.1} parent=27 // loop_footer
          %s211 = sadd.s32 1, %s207
        $region42: #{tpu_custom_call.1} parent=27 // loop_footer_branch
          %206 = sbr.rel target = $region38
        $region43: #{tpu_custom_call.1} parent=27 // loop_exit
          _
        %v902 = vlaneseq
        %v903 = vshrl.u32 %v902, 7
        %v904 = vlaneseq
        %v905 = vand.u32 %v904, 127
        %vm906 = vcmp.eq.s32.totalorder %v903, 0
        %vm907 = vcmp.eq.s32.totalorder %v905, 0
        %vm908 = vmand %vm906, %vm907
        %v909 = vstv %s212
        %v910 = vsel %vm908, %v909, 0.0
        %911 = vst [vmem:[%s204] sm:$0xff] %v910
        %s912 = sand.u32 %s87, 1
        %s913 = scalar_lea.sflag [#allocation6], %s912
        %s914 = sand.u32 %s87, 1
        %s915 = smul.addr %s914, 8
        %s916 = scalar_lea.vmem [#allocation9], %s915
        // Predicated region
        $region44: #{tpu_custom_call.1} parent=27 // pred_check
          %p917 = pneg %p97
        $region45: #{tpu_custom_call.1} parent=27 // pred_check_branch
          %919 = sbr.rel (%p917) target = $region47
        $region46: #{tpu_custom_call.1} parent=27 // pred_region
          %s921 = ssub.s32 128, 128
          %922 = vsyncadd %s913, %s921
          %s923 = smul.addr %s27, 128
          %s924 = scalar_lea.hbm %s3, %s923
          %s926 = sshll.u32 %s916, 4
          %s927 = int_to_ptr.vmem [resolvable:$true] %s926
          %929 = dma.vmem_to_hbm [thread:$0]  %s927, 128, %s924, %s913
        $region47: #{tpu_custom_call.1} parent=27 // pred_fallthru
          _
      $region28: #{tpu_custom_call.1} parent=5 // pred_fallthru
        _
      %p930 = scmp.le.s32.totalorder 2, %s22
      // Predicated region
      $region48: #{tpu_custom_call.1} parent=5 // pred_check
        %p931 = pneg %p930
      $region49: #{tpu_custom_call.1} parent=5 // pred_check_branch
        %933 = sbr.rel (%p931) target = $region51
      $region50: #{tpu_custom_call.1} parent=5 // pred_region
        %s934 = ssub.s32 %s22, 2
        // Predicated region
        $region52: #{tpu_custom_call.1} parent=50 // pred_check
          %p935 = pneg %p103
        $region53: #{tpu_custom_call.1} parent=50 // pred_check_branch
          %937 = sbr.rel (%p935) target = $region55
        $region54: #{tpu_custom_call.1} parent=50 // pred_region
          %s938 = sand.u32 %s88, 1
          %s939 = scalar_lea.sflag [#allocation6], %s938
          %s940 = sand.u32 %s88, 1
          %s941 = smul.addr %s940, 8
          %s942 = scalar_lea.vmem [#allocation9], %s941
          %943 = dma.done %s939, 128
        $region55: #{tpu_custom_call.1} parent=50 // pred_fallthru
          _
      $region51: #{tpu_custom_call.1} parent=5 // pred_fallthru
        _
    $region6: #{tpu_custom_call.1} parent=1 // loop_footer
      %s26 = sadd.s32 1, %s22
    $region7: #{tpu_custom_call.1} parent=1 // loop_footer_branch
      %21 = sbr.rel target = $region3
    $region8: #{tpu_custom_call.1} parent=1 // loop_exit
      _
    %944 = vsyncpa [#allocation5], 1
    %s945 = scalar_lea.sflag [#allocation5], 1
    %946 = vsyncpa %s945, 1
    %947 = vsyncpa [#allocation8], 1
    %s948 = scalar_lea.sflag [#allocation8], 1
    %949 = vsyncpa %s948, 1
    %950 = vsyncpa [#allocation6], 1
    %s951 = scalar_lea.sflag [#allocation6], 1
    %952 = vsyncpa %s951, 1

</llo_original>
